<compile_context>
chip_gen: v7x
topology: tpu7x:2x2x1
jax: 0.10.0
libtpu: 0.0.40
codegen_flags: <defaults>
</compile_context>

<pallas_src>
import jax
import jax.numpy as jnp
from jax.experimental import pallas as pl
from jax.experimental.pallas import tpu as pltpu


def _round_up(x, m):
    return (x + m - 1) // m * m


def _critic_mlp_kernel(x_ref, w1_ref, b1_ref, w2_ref, b2_ref,
                       w3_ref, b3_ref, w4_ref, o_ref):
    # x_ref: (tm, 16) tile of rows.  w1/w2/w3 are bf16 (pre-cast in wrapper),
    # biases and w4 are f32.  All accumulation is f32; elementwise math is f32.
    x = x_ref[...].astype(jnp.bfloat16)

    def sigmoid(v):
        # EUP-friendly sigmoid: tanh lands on the EUP slot, no VALU divide.
        return 0.5 * jnp.tanh(0.5 * v) + 0.5

    h = sigmoid(jnp.dot(x, w1_ref[...],
                        preferred_element_type=jnp.float32) + b1_ref[...])
    h = sigmoid(jnp.dot(h.astype(jnp.bfloat16), w2_ref[...],
                        preferred_element_type=jnp.float32) + b2_ref[...])
    h = sigmoid(jnp.dot(h.astype(jnp.bfloat16), w3_ref[...],
                        preferred_element_type=jnp.float32) + b3_ref[...])
    # Final 16 -> 1 layer on the VPU: broadcast-multiply + lane reduce instead
    # of an N=1 MXU push (uses 1/256 of the MXU width for a full push).
    out = jnp.sum(h * w4_ref[...], axis=-1, keepdims=True)
    o_ref[...] = out.astype(o_ref.dtype)


def critic_forward_pallas(x, params, *, tm=2048):
    """Fused Critic MLP forward.  x: (..., 16) encoder features."""
    w1, b1, w2, b2, w3, b3, w4 = params

    lead_shape = x.shape[:-1]
    f_in = x.shape[-1]
    x_rows = x.reshape(-1, f_in)
    B = x_rows.shape[0]

    # PyTorch Linear stores (out, in); kernel wants (in, out).  MXU-layer
    # weights are cast to bf16 once here; w4 stays f32 (VPU reduce) and is
    # passed as a (1, 16) row; biases stay f32.  Total weights < 20 KB.
    w1t = w1.T.astype(jnp.bfloat16)
    w2t = w2.T.astype(jnp.bfloat16)
    w3t = w3.T.astype(jnp.bfloat16)
    w4r = w4.reshape(1, -1).astype(jnp.float32)
    b1r, b2r, b3r = b1.reshape(1, -1), b2.reshape(1, -1), b3.reshape(1, -1)

    h1 = w1t.shape[1]   # 64
    h2 = w2t.shape[1]   # 32
    h3 = w3t.shape[1]   # 16

    # Rows aligned only to the 8-sublane multiple (tiny pad, and only when
    # needed); the grid uses cdiv and the last block may be partial.
    M8 = _round_up(B, 8)

    # Keep >= 2 grid steps on mid/large batches so v7x's two TensorCores both
    # get work via the "parallel" axis (single-TC v5e/v6e: harmless).
    cap = _round_up(pl.cdiv(M8, 2), 8) if B > 256 else M8
    tm = max(8, min(tm, cap))

    if M8 != B:
        x_rows = jnp.pad(x_rows, ((0, M8 - B), (0, 0)))

    grid = (pl.cdiv(M8, tm),)

    out_rows = pl.pallas_call(
        _critic_mlp_kernel,
        out_shape=jax.ShapeDtypeStruct((M8, 1), x.dtype),
        grid_spec=pltpu.PrefetchScalarGridSpec(
            num_scalar_prefetch=0,
            grid=grid,
            in_specs=[
                pl.BlockSpec((tm, f_in), lambda i: (i, 0)),   # x tile (streamed)
                pl.BlockSpec((f_in, h1), lambda i: (0, 0)),   # W1^T (bf16)
                pl.BlockSpec((1, h1),    lambda i: (0, 0)),   # b1
                pl.BlockSpec((h1, h2),   lambda i: (0, 0)),   # W2^T (bf16)
                pl.BlockSpec((1, h2),    lambda i: (0, 0)),   # b2
                pl.BlockSpec((h2, h3),   lambda i: (0, 0)),   # W3^T (bf16)
                pl.BlockSpec((1, h3),    lambda i: (0, 0)),   # b3
                pl.BlockSpec((1, h3),    lambda i: (0, 0)),   # W4 row (f32)
            ],
            out_specs=pl.BlockSpec((tm, 1), lambda i: (i, 0)),
        ),
        compiler_params=pltpu.CompilerParams(
            dimension_semantics=("parallel",),
        ),
    )(x_rows, w1t, b1r, w2t, b2r, w3t, b3r, w4r)

    out_rows = out_rows[:B]
    return out_rows.reshape(*lead_shape, 1)


def _linear_init(key, fan_out, fan_in, bias=True, dtype=jnp.float32):
    # Mimics nn.Linear default init: U(-1/sqrt(fan_in), 1/sqrt(fan_in)).
    kw, kb = jax.random.split(key)
    bound = 1.0 / (fan_in ** 0.5)
    w = jax.random.uniform(kw, (fan_out, fan_in),
                           minval=-bound, maxval=bound, dtype=dtype)
    if bias:
        b = jax.random.uniform(kb, (fan_out,),
                               minval=-bound, maxval=bound, dtype=dtype)
        return w, b
    return w, None


def _ref_forward(x, params):
    w1, b1, w2, b2, w3, b3, w4 = params
    h = jax.nn.sigmoid(x @ w1.T + b1)
    h = jax.nn.sigmoid(h @ w2.T + b2)
    h = jax.nn.sigmoid(h @ w3.T + b3)
    return h @ w4.T


if __name__ == "__main__":
    key = jax.random.PRNGKey(0)
    k_x, k_x2, k1, k2, k3, k4 = jax.random.split(key, 6)

    # hidden_channels=4 -> hidden_channels list [4, 8, 16, 32, 64]
    H4, H3, H2 = 64, 32, 16
    F_IN = 16                       # dense1 in_features
    BATCH, SEQ = 2, 8               # small shapes; x = encoder output features

    w1, b1 = _linear_init(k1, H4, F_IN)          # Linear(16, 64)
    w2, b2 = _linear_init(k2, H3, H4)            # Linear(64, 32)
    w3, b3 = _linear_init(k3, H2, H3)            # Linear(32, 16)
    w4, _ = _linear_init(k4, 1, H2, bias=False)  # Linear(16, 1, bias=False)
    params = (w1, b1, w2, b2, w3, b3, w4)

    # Case 1: tiny shape (single grid step).
    x = jax.random.normal(k_x, (BATCH, SEQ, F_IN), dtype=jnp.float32)
    out = jax.block_until_ready(critic_forward_pallas(x, params))
    ref = _ref_forward(x, params)
    assert out.shape == (BATCH, SEQ, 1), out.shape
    # bf16 matmul operands -> relaxed tolerance vs the f32 reference.
    assert jnp.allclose(out, ref, atol=2e-2, rtol=2e-2), (
        float(jnp.max(jnp.abs(out - ref))))

    # Case 2: rows not a multiple of the tile -> multi-step grid with a
    # partial last block plus the 8-row alignment pad path.
    x2 = jax.random.normal(k_x2, (3, 200, F_IN), dtype=jnp.float32)  # 600 rows
    out2 = jax.block_until_ready(critic_forward_pallas(x2, params, tm=256))
    ref2 = _ref_forward(x2, params)
    assert out2.shape == (3, 200, 1), out2.shape
    assert jnp.allclose(out2, ref2, atol=2e-2, rtol=2e-2), (
        float(jnp.max(jnp.abs(out2 - ref2))))

    print("KERNEL_OK")
</pallas_src>

<mosaic_0001>
module attributes {stable_mosaic.version = 11 : i64} {
  func.func @_critic_mlp_kernel(%arg0: i32, %arg1: memref<16x16xf32, #tpu.memory_space<vmem>>, %arg2: memref<16x64xbf16, #tpu.memory_space<vmem>>, %arg3: memref<1x64xf32, #tpu.memory_space<vmem>>, %arg4: memref<64x32xbf16, #tpu.memory_space<vmem>>, %arg5: memref<1x32xf32, #tpu.memory_space<vmem>>, %arg6: memref<32x16xbf16, #tpu.memory_space<vmem>>, %arg7: memref<1x16xf32, #tpu.memory_space<vmem>>, %arg8: memref<1x16xf32, #tpu.memory_space<vmem>>, %arg9: memref<16x1xf32, #tpu.memory_space<vmem>>) attributes {dimension_semantics = [#tpu.dimension_semantics<parallel>], iteration_bounds = array<i64: 1>, scalar_prefetch = 0 : i64, scratch_operands = 0 : i64, tpu.core_type = #tpu.core_type<tc>, window_params = [{transform_indices = @transform_0, window_bounds = array<i64: 16, 16>}, {pipeline_mode = #tpu.pipeline_mode<synchronous>, transform_indices = @transform_1, window_bounds = array<i64: 16, 64>}, {pipeline_mode = #tpu.pipeline_mode<synchronous>, transform_indices = @transform_2, window_bounds = array<i64: 1, 64>}, {pipeline_mode = #tpu.pipeline_mode<synchronous>, transform_indices = @transform_3, window_bounds = array<i64: 64, 32>}, {pipeline_mode = #tpu.pipeline_mode<synchronous>, transform_indices = @transform_4, window_bounds = array<i64: 1, 32>}, {pipeline_mode = #tpu.pipeline_mode<synchronous>, transform_indices = @transform_5, window_bounds = array<i64: 32, 16>}, {pipeline_mode = #tpu.pipeline_mode<synchronous>, transform_indices = @transform_6, window_bounds = array<i64: 1, 16>}, {pipeline_mode = #tpu.pipeline_mode<synchronous>, transform_indices = @transform_7, window_bounds = array<i64: 1, 16>}, {transform_indices = @transform_8, window_bounds = array<i64: 16, 1>}]} {
    %c0 = arith.constant 0 : index
    %c0_0 = arith.constant 0 : index
    %0 = vector.load %arg1[%c0, %c0_0] : memref<16x16xf32, #tpu.memory_space<vmem>>, vector<16x16xf32>
    %1 = arith.truncf %0 : vector<16x16xf32> to vector<16x16xbf16>
    %c0_1 = arith.constant 0 : index
    %c0_2 = arith.constant 0 : index
    %2 = vector.load %arg2[%c0_1, %c0_2] : memref<16x64xbf16, #tpu.memory_space<vmem>>, vector<16x64xbf16>
    %cst = arith.constant dense<0.000000e+00> : vector<16x64xf32>
    %3 = tpu.matmul %1, %2, %cst {dimension_numbers = #tpu.dot_dimension_numbers<[1], [0], [0], [1], [0, 0, 1, 1], [], []>} : vector<16x16xbf16>, vector<16x64xbf16>, vector<16x64xf32> -> vector<16x64xf32>
    %c0_3 = arith.constant 0 : index
    %c0_4 = arith.constant 0 : index
    %4 = vector.load %arg3[%c0_3, %c0_4] : memref<1x64xf32, #tpu.memory_space<vmem>>, vector<1x64xf32>
    %5 = vector.broadcast %4 : vector<1x64xf32> to vector<16x64xf32>
    %6 = arith.addf %3, %5 : vector<16x64xf32>
    %cst_5 = arith.constant 5.000000e-01 : f32
    %7 = vector.broadcast %cst_5 : f32 to vector<16x64xf32>
    %8 = arith.mulf %7, %6 : vector<16x64xf32>
    %9 = math.tanh %8 : vector<16x64xf32>
    %cst_6 = arith.constant 5.000000e-01 : f32
    %10 = vector.broadcast %cst_6 : f32 to vector<16x64xf32>
    %11 = arith.mulf %10, %9 : vector<16x64xf32>
    %cst_7 = arith.constant 5.000000e-01 : f32
    %12 = vector.broadcast %cst_7 : f32 to vector<16x64xf32>
    %13 = arith.addf %11, %12 : vector<16x64xf32>
    %14 = arith.truncf %13 : vector<16x64xf32> to vector<16x64xbf16>
    %c0_8 = arith.constant 0 : index
    %c0_9 = arith.constant 0 : index
    %15 = vector.load %arg4[%c0_8, %c0_9] : memref<64x32xbf16, #tpu.memory_space<vmem>>, vector<64x32xbf16>
    %cst_10 = arith.constant dense<0.000000e+00> : vector<16x32xf32>
    %16 = tpu.matmul %14, %15, %cst_10 {dimension_numbers = #tpu.dot_dimension_numbers<[1], [0], [0], [1], [0, 0, 1, 1], [], []>} : vector<16x64xbf16>, vector<64x32xbf16>, vector<16x32xf32> -> vector<16x32xf32>
    %c0_11 = arith.constant 0 : index
    %c0_12 = arith.constant 0 : index
    %17 = vector.load %arg5[%c0_11, %c0_12] : memref<1x32xf32, #tpu.memory_space<vmem>>, vector<1x32xf32>
    %18 = vector.broadcast %17 : vector<1x32xf32> to vector<16x32xf32>
    %19 = arith.addf %16, %18 : vector<16x32xf32>
    %cst_13 = arith.constant 5.000000e-01 : f32
    %20 = vector.broadcast %cst_13 : f32 to vector<16x32xf32>
    %21 = arith.mulf %20, %19 : vector<16x32xf32>
    %22 = math.tanh %21 : vector<16x32xf32>
    %cst_14 = arith.constant 5.000000e-01 : f32
    %23 = vector.broadcast %cst_14 : f32 to vector<16x32xf32>
    %24 = arith.mulf %23, %22 : vector<16x32xf32>
    %cst_15 = arith.constant 5.000000e-01 : f32
    %25 = vector.broadcast %cst_15 : f32 to vector<16x32xf32>
    %26 = arith.addf %24, %25 : vector<16x32xf32>
    %27 = arith.truncf %26 : vector<16x32xf32> to vector<16x32xbf16>
    %c0_16 = arith.constant 0 : index
    %c0_17 = arith.constant 0 : index
    %28 = vector.load %arg6[%c0_16, %c0_17] : memref<32x16xbf16, #tpu.memory_space<vmem>>, vector<32x16xbf16>
    %cst_18 = arith.constant dense<0.000000e+00> : vector<16x16xf32>
    %29 = tpu.matmul %27, %28, %cst_18 {dimension_numbers = #tpu.dot_dimension_numbers<[1], [0], [0], [1], [0, 0, 1, 1], [], []>} : vector<16x32xbf16>, vector<32x16xbf16>, vector<16x16xf32> -> vector<16x16xf32>
    %c0_19 = arith.constant 0 : index
    %c0_20 = arith.constant 0 : index
    %30 = vector.load %arg7[%c0_19, %c0_20] : memref<1x16xf32, #tpu.memory_space<vmem>>, vector<1x16xf32>
    %31 = vector.broadcast %30 : vector<1x16xf32> to vector<16x16xf32>
    %32 = arith.addf %29, %31 : vector<16x16xf32>
    %cst_21 = arith.constant 5.000000e-01 : f32
    %33 = vector.broadcast %cst_21 : f32 to vector<16x16xf32>
    %34 = arith.mulf %33, %32 : vector<16x16xf32>
    %35 = math.tanh %34 : vector<16x16xf32>
    %cst_22 = arith.constant 5.000000e-01 : f32
    %36 = vector.broadcast %cst_22 : f32 to vector<16x16xf32>
    %37 = arith.mulf %36, %35 : vector<16x16xf32>
    %cst_23 = arith.constant 5.000000e-01 : f32
    %38 = vector.broadcast %cst_23 : f32 to vector<16x16xf32>
    %39 = arith.addf %37, %38 : vector<16x16xf32>
    %c0_24 = arith.constant 0 : index
    %c0_25 = arith.constant 0 : index
    %40 = vector.load %arg8[%c0_24, %c0_25] : memref<1x16xf32, #tpu.memory_space<vmem>>, vector<1x16xf32>
    %41 = vector.broadcast %40 : vector<1x16xf32> to vector<16x16xf32>
    %42 = arith.mulf %39, %41 : vector<16x16xf32>
    %cst_26 = arith.constant dense<0.000000e+00> : vector<16xf32>
    %43 = vector.multi_reduction <add>, %42, %cst_26 [1] : vector<16x16xf32> to vector<16xf32>
    %44 = vector.shape_cast %43 : vector<16xf32> to vector<16x1xf32>
    %c0_27 = arith.constant 0 : index
    %c0_28 = arith.constant 0 : index
    %45 = vector.load %arg9[%c0_27, %c0_28] : memref<16x1xf32, #tpu.memory_space<vmem>>, vector<16x1xf32>
    tpu.vector_store %arg9[%c0_27, %c0_28], %44 {strides = array<i32>} : memref<16x1xf32, #tpu.memory_space<vmem>>, vector<16x1xf32>,
    return
  }
  func.func @transform_0(%arg0: i32) -> (i32, i32) {
    %c0_i32 = arith.constant 0 : i32
    %c0_i32_0 = arith.constant 0 : i32
    return %arg0, %c0_i32 : i32, i32
  }
  func.func @transform_1(%arg0: i32) -> (i32, i32) {
    %c0_i32 = arith.constant 0 : i32
    %c0_i32_0 = arith.constant 0 : i32
    %c0_i32_1 = arith.constant 0 : i32
    return %c0_i32, %c0_i32_0 : i32, i32
  }
  func.func @transform_2(%arg0: i32) -> (i32, i32) {
    %c0_i32 = arith.constant 0 : i32
    %c0_i32_0 = arith.constant 0 : i32
    %c0_i32_1 = arith.constant 0 : i32
    return %c0_i32, %c0_i32_0 : i32, i32
  }
  func.func @transform_3(%arg0: i32) -> (i32, i32) {
    %c0_i32 = arith.constant 0 : i32
    %c0_i32_0 = arith.constant 0 : i32
    %c0_i32_1 = arith.constant 0 : i32
    return %c0_i32, %c0_i32_0 : i32, i32
  }
  func.func @transform_4(%arg0: i32) -> (i32, i32) {
    %c0_i32 = arith.constant 0 : i32
    %c0_i32_0 = arith.constant 0 : i32
    %c0_i32_1 = arith.constant 0 : i32
    return %c0_i32, %c0_i32_0 : i32, i32
  }
  func.func @transform_5(%arg0: i32) -> (i32, i32) {
    %c0_i32 = arith.constant 0 : i32
    %c0_i32_0 = arith.constant 0 : i32
    %c0_i32_1 = arith.constant 0 : i32
    return %c0_i32, %c0_i32_0 : i32, i32
  }
  func.func @transform_6(%arg0: i32) -> (i32, i32) {
    %c0_i32 = arith.constant 0 : i32
    %c0_i32_0 = arith.constant 0 : i32
    %c0_i32_1 = arith.constant 0 : i32
    return %c0_i32, %c0_i32_0 : i32, i32
  }
  func.func @transform_7(%arg0: i32) -> (i32, i32) {
    %c0_i32 = arith.constant 0 : i32
    %c0_i32_0 = arith.constant 0 : i32
    %c0_i32_1 = arith.constant 0 : i32
    return %c0_i32, %c0_i32_0 : i32, i32
  }
  func.func @transform_8(%arg0: i32) -> (i32, i32) {
    %c0_i32 = arith.constant 0 : i32
    %c0_i32_0 = arith.constant 0 : i32
    return %arg0, %c0_i32 : i32, i32
  }
}

</mosaic_0001>

<llo_original>
// kernel: tpu_custom_call.1
$region0: #{tpu_custom_call.1}
  #allocation0 [shape = 'u32[]', space=smem, size = 0x4, offset = 0x4, fixed_abs, tag = 'smem constant byte address 0x4 - core index']
  #allocation1 [shape = 'u32[144,128]{1,0:T(1,128)}', space=vmem, size = 0x12000, scoped, tag = 'internal scratch']
  %s0 = inlined_call_operand.vmem [shape: f32[16,16], index: 0, kind: input, shape index: {}]
  %s1 = inlined_call_operand.vmem [shape: bf16[16,64], index: 1, kind: input, shape index: {}]
  %s2 = inlined_call_operand.vmem [shape: f32[1,64], index: 2, kind: input, shape index: {}]
  %s3 = inlined_call_operand.vmem [shape: bf16[64,32], index: 3, kind: input, shape index: {}]
  %s4 = inlined_call_operand.vmem [shape: f32[1,32], index: 4, kind: input, shape index: {}]
  %s5 = inlined_call_operand.vmem [shape: bf16[32,16], index: 5, kind: input, shape index: {}]
  %s6 = inlined_call_operand.vmem [shape: f32[1,16], index: 6, kind: input, shape index: {}]
  %s7 = inlined_call_operand.vmem [shape: f32[1,16], index: 7, kind: input, shape index: {}]
  %s8 = inlined_call_operand.vmem [shape: f32[16,1], index: 8, kind: output, shape index: {}]
  %s9 = sld [smem:[#allocation0]]
  $region42: #{tpu_custom_call.1} parent=0
    _
  %s11 = ssub.s32 1, %s9
  %s12 = scalar_select 0, %s11, %s9
  // Predicated region
  $region2: #{tpu_custom_call.1} parent=0 // pred_check
    _
  $region3: #{tpu_custom_call.1} parent=0 // pred_check_branch
    %14 = sbr.rel (0) target = $region5
  $region4: #{tpu_custom_call.1} parent=0 // pred_region
    _
  $region5: #{tpu_custom_call.1} parent=0 // pred_fallthru
    _
  // Predicated region
  $region6: #{tpu_custom_call.1} parent=0 // pred_check
    _
  $region7: #{tpu_custom_call.1} parent=0 // pred_check_branch
    %16 = sbr.rel (0) target = $region9
  $region8: #{tpu_custom_call.1} parent=0 // pred_region
    _
  $region9: #{tpu_custom_call.1} parent=0 // pred_fallthru
    _
  // Predicated region
  $region10: #{tpu_custom_call.1} parent=0 // pred_check
    _
  $region11: #{tpu_custom_call.1} parent=0 // pred_check_branch
    %18 = sbr.rel (0) target = $region13
  $region12: #{tpu_custom_call.1} parent=0 // pred_region
    _
  $region13: #{tpu_custom_call.1} parent=0 // pred_fallthru
    _
  // Predicated region
  $region14: #{tpu_custom_call.1} parent=0 // pred_check
    _
  $region15: #{tpu_custom_call.1} parent=0 // pred_check_branch
    %20 = sbr.rel (0) target = $region17
  $region16: #{tpu_custom_call.1} parent=0 // pred_region
    _
  $region17: #{tpu_custom_call.1} parent=0 // pred_fallthru
    _
  // Predicated region
  $region18: #{tpu_custom_call.1} parent=0 // pred_check
    _
  $region19: #{tpu_custom_call.1} parent=0 // pred_check_branch
    %22 = sbr.rel (0) target = $region21
  $region20: #{tpu_custom_call.1} parent=0 // pred_region
    _
  $region21: #{tpu_custom_call.1} parent=0 // pred_fallthru
    _
  // Predicated region
  $region22: #{tpu_custom_call.1} parent=0 // pred_check
    _
  $region23: #{tpu_custom_call.1} parent=0 // pred_check_branch
    %24 = sbr.rel (0) target = $region25
  $region24: #{tpu_custom_call.1} parent=0 // pred_region
    _
  $region25: #{tpu_custom_call.1} parent=0 // pred_fallthru
    _
  // Predicated region
  $region26: #{tpu_custom_call.1} parent=0 // pred_check
    _
  $region27: #{tpu_custom_call.1} parent=0 // pred_check_branch
    %26 = sbr.rel (0) target = $region29
  $region28: #{tpu_custom_call.1} parent=0 // pred_region
    _
  $region29: #{tpu_custom_call.1} parent=0 // pred_fallthru
    _
  // Predicated region
  $region30: #{tpu_custom_call.1} parent=0 // pred_check
    _
  $region31: #{tpu_custom_call.1} parent=0 // pred_check_branch
    %28 = sbr.rel (0) target = $region33
  $region32: #{tpu_custom_call.1} parent=0 // pred_region
    _
  $region33: #{tpu_custom_call.1} parent=0 // pred_fallthru
    _
  %v30 = vld [vmem:[%s0] sm:$0xff]
  %v31 = vld [vmem:[%s0 + $0x8] sm:$0xff]
  %v32 = vpack.c.bf16 %v31, %v30
  %v33 = vld [vmem:[%s1] sm:$0xf]
  %v34 = vld [vmem:[%s1 + $0x4] sm:$0xf]
  %v35 = vld [vmem:[%s2] sm:$0x1]
  %v37 = vlaneseq
  %v38 = vshrl.u32 %v37, 7
  %v39 = vsub.s32 0, %v38
  %v40 = vrot.slane %v35, %v39
  %v44 = vunpack.c.l.b16 %v33
  %v45 = vunpack.c.l.b16 %v34
  %v46 = vpack.c.b16 %v45, %v44
  %vm48 = vcmask 130048
  %v50 = vsel %vm48, %v32, 0
  %52 = vmatprep.subr.bf16.mxu0 0
  %53 = vmatpush1.bf16.msra.mxu0 %v46
  %54 = vmatprep.subr.bf16.mxu0 0
  %55 = vmatpush1.bf16.msra.mxu0 0
  %56 = vmatprep.subr.bf16.mxu0 0
  %57 = vmatpush1.bf16.msra.mxu0 0
  %58 = vmatprep.subr.bf16.mxu0 0
  %59 = vmatpush1.bf16.msra.mxu0 0
  %60 = vmatprep.subr.bf16.mxu0 0
  %61 = vmatpush1.bf16.msra.mxu0 0
  %62 = vmatprep.subr.bf16.mxu0 0
  %63 = vmatpush1.bf16.msra.mxu0 0
  %64 = vmatprep.subr.bf16.mxu0 0
  %65 = vmatpush1.bf16.msra.mxu0 0
  %66 = vmatprep.subr.bf16.mxu0 0
  %67 = vmatpush1.bf16.msra.mxu0 0
  %68 = vmatprep.subr.bf16.mxu0 0
  %69 = vmatpush1.bf16.msra.mxu0 0
  %70 = vmatprep.subr.bf16.mxu0 0
  %71 = vmatpush1.bf16.msra.mxu0 0
  %72 = vmatprep.subr.bf16.mxu0 0
  %73 = vmatpush1.bf16.msra.mxu0 0
  %74 = vmatprep.subr.bf16.mxu0 0
  %75 = vmatpush1.bf16.msra.mxu0 0
  %76 = vmatprep.subr.bf16.mxu0 0
  %77 = vmatpush1.bf16.msra.mxu0 0
  %78 = vmatprep.subr.bf16.mxu0 0
  %79 = vmatpush1.bf16.msra.mxu0 0
  %80 = vmatprep.subr.bf16.mxu0 0
  %81 = vmatpush1.bf16.msra.mxu0 0
  %82 = vmatprep.subr.bf16.mxu0 0
  %83 = vmatpush1.bf16.msra.mxu0 0
  %84 = vmatprep.mubr.bf16.mxu0 0
  %85 = vmatmul.mubr.bf16.gmra.mrb[0].mxu0 %v50
  %v86 = vpop.f32.mrb[0].mxu0
  %v87 = vadd.f32 %v40, %v86
  %v88 = vpop.f32.mrb[0].mxu0
  %v89 = vpop.f32.mrb[0].mxu0
  %v90 = vadd.f32 %v40, %v89
  %v91 = vpop.f32.mrb[0].mxu0
  %92 = vdwg.mxu0
  %v93 = vmul.f32 %v87, 0.5
  %v94 = vmul.f32 %v90, 0.5
  %v95 = vtanh.pop %v93
  %v96 = vtanh.pop %v94
  %v97 = vmul.f32 %v95, 0.5
  %v98 = vmul.f32 %v96, 0.5
  %v99 = vadd.f32 %v97, 0.5
  %v100 = vadd.f32 %v98, 0.5
  %v101 = vpack.c.bf16 %v100, %v99
  %v102 = vld [vmem:[%s3] sm:$0xf]
  %v103 = vld [vmem:[%s3 + $0x4] sm:$0xf]
  %v104 = vld [vmem:[%s3 + $0x8] sm:$0xf]
  %v105 = vld [vmem:[%s3 + $0xc] sm:$0xf]
  %v106 = vld [vmem:[%s3 + $0x10] sm:$0xf]
  %v107 = vld [vmem:[%s3 + $0x14] sm:$0xf]
  %v108 = vld [vmem:[%s3 + $0x18] sm:$0xf]
  %v109 = vld [vmem:[%s3 + $0x1c] sm:$0xf]
  %v110 = vld [vmem:[%s4] sm:$0x1]
  %v112 = vlaneseq
  %v113 = vshrl.u32 %v112, 7
  %v114 = vsub.s32 0, %v113
  %v115 = vrot.slane %v110, %v114
  %v125 = vunpack.c.l.b16 %v102
  %v126 = vunpack.c.l.b16 %v103
  %v127 = vunpack.c.l.b16 %v104
  %v128 = vunpack.c.l.b16 %v105
  %v129 = vunpack.c.l.b16 %v106
  %v130 = vunpack.c.l.b16 %v107
  %v131 = vunpack.c.l.b16 %v108
  %v132 = vunpack.c.l.b16 %v109
  %v133 = vpack.c.b16 %v126, %v125
  %v134 = vpack.c.b16 %v128, %v127
  %v135 = vpack.c.b16 %v130, %v129
  %v136 = vpack.c.b16 %v132, %v131
  %vm141 = vcmask 523264
  %v143 = vsel %vm141, %v101, 0
  %145 = vmatprep.subr.bf16.mxu0 0
  %146 = vmatpush1.bf16.msra.mxu0 %v133
  %147 = vmatprep.subr.bf16.mxu0 0
  %148 = vmatpush1.bf16.msra.mxu0 %v134
  %149 = vmatprep.subr.bf16.mxu0 0
  %150 = vmatpush1.bf16.msra.mxu0 %v135
  %151 = vmatprep.subr.bf16.mxu0 0
  %152 = vmatpush1.bf16.msra.mxu0 %v136
  %153 = vmatprep.subr.bf16.mxu0 0
  %154 = vmatpush1.bf16.msra.mxu0 0
  %155 = vmatprep.subr.bf16.mxu0 0
  %156 = vmatpush1.bf16.msra.mxu0 0
  %157 = vmatprep.subr.bf16.mxu0 0
  %158 = vmatpush1.bf16.msra.mxu0 0
  %159 = vmatprep.subr.bf16.mxu0 0
  %160 = vmatpush1.bf16.msra.mxu0 0
  %161 = vmatprep.subr.bf16.mxu0 0
  %162 = vmatpush1.bf16.msra.mxu0 0
  %163 = vmatprep.subr.bf16.mxu0 0
  %164 = vmatpush1.bf16.msra.mxu0 0
  %165 = vmatprep.subr.bf16.mxu0 0
  %166 = vmatpush1.bf16.msra.mxu0 0
  %167 = vmatprep.subr.bf16.mxu0 0
  %168 = vmatpush1.bf16.msra.mxu0 0
  %169 = vmatprep.subr.bf16.mxu0 0
  %170 = vmatpush1.bf16.msra.mxu0 0
  %171 = vmatprep.subr.bf16.mxu0 0
  %172 = vmatpush1.bf16.msra.mxu0 0
  %173 = vmatprep.subr.bf16.mxu0 0
  %174 = vmatpush1.bf16.msra.mxu0 0
  %175 = vmatprep.subr.bf16.mxu0 0
  %176 = vmatpush1.bf16.msra.mxu0 0
  %177 = vmatprep.mubr.bf16.mxu0 0
  %178 = vmatmul.mubr.bf16.gmra.mrb[0].mxu0 %v143
  %v179 = vpop.f32.mrb[0].mxu0
  %v180 = vadd.f32 %v115, %v179
  %v181 = vpop.f32.mrb[0].mxu0
  %v182 = vpop.f32.mrb[0].mxu0
  %v183 = vadd.f32 %v115, %v182
  %v184 = vpop.f32.mrb[0].mxu0
  %185 = vdwg.mxu0
  %v186 = vmul.f32 %v180, 0.5
  %v187 = vmul.f32 %v183, 0.5
  %v188 = vtanh.pop %v186
  %v189 = vtanh.pop %v187
  %v190 = vmul.f32 %v188, 0.5
  %v191 = vmul.f32 %v189, 0.5
  %v192 = vadd.f32 %v190, 0.5
  %v193 = vadd.f32 %v191, 0.5
  %v194 = vpack.c.bf16 %v193, %v192
  %v195 = vld [vmem:[%s5] sm:$0xf]
  %v196 = vld [vmem:[%s5 + $0x4] sm:$0xf]
  %v197 = vld [vmem:[%s5 + $0x8] sm:$0xf]
  %v198 = vld [vmem:[%s5 + $0xc] sm:$0xf]
  %v199 = vld [vmem:[%s6] sm:$0x1]
  %v201 = vlaneseq
  %v202 = vshrl.u32 %v201, 7
  %v203 = vsub.s32 0, %v202
  %v204 = vrot.slane %v199, %v203
  %v210 = vunpack.c.l.b16 %v195
  %v211 = vunpack.c.l.b16 %v196
  %v212 = vunpack.c.l.b16 %v197
  %v213 = vunpack.c.l.b16 %v198
  %v214 = vpack.c.b16 %v211, %v210
  %v215 = vpack.c.b16 %v213, %v212
  %vm218 = vcmask 261120
  %v220 = vsel %vm218, %v194, 0
  %222 = vmatprep.subr.bf16.mxu0 0
  %223 = vmatpush1.bf16.msra.mxu0 %v214
  %224 = vmatprep.subr.bf16.mxu0 0
  %225 = vmatpush1.bf16.msra.mxu0 %v215
  %226 = vmatprep.subr.bf16.mxu0 0
  %227 = vmatpush1.bf16.msra.mxu0 0
  %228 = vmatprep.subr.bf16.mxu0 0
  %229 = vmatpush1.bf16.msra.mxu0 0
  %230 = vmatprep.subr.bf16.mxu0 0
  %231 = vmatpush1.bf16.msra.mxu0 0
  %232 = vmatprep.subr.bf16.mxu0 0
  %233 = vmatpush1.bf16.msra.mxu0 0
  %234 = vmatprep.subr.bf16.mxu0 0
  %235 = vmatpush1.bf16.msra.mxu0 0
  %236 = vmatprep.subr.bf16.mxu0 0
  %237 = vmatpush1.bf16.msra.mxu0 0
  %238 = vmatprep.subr.bf16.mxu0 0
  %239 = vmatpush1.bf16.msra.mxu0 0
  %240 = vmatprep.subr.bf16.mxu0 0
  %241 = vmatpush1.bf16.msra.mxu0 0
  %242 = vmatprep.subr.bf16.mxu0 0
  %243 = vmatpush1.bf16.msra.mxu0 0
  %244 = vmatprep.subr.bf16.mxu0 0
  %245 = vmatpush1.bf16.msra.mxu0 0
  %246 = vmatprep.subr.bf16.mxu0 0
  %247 = vmatpush1.bf16.msra.mxu0 0
  %248 = vmatprep.subr.bf16.mxu0 0
  %249 = vmatpush1.bf16.msra.mxu0 0
  %250 = vmatprep.subr.bf16.mxu0 0
  %251 = vmatpush1.bf16.msra.mxu0 0
  %252 = vmatprep.subr.bf16.mxu0 0
  %253 = vmatpush1.bf16.msra.mxu0 0
  %254 = vmatprep.mubr.bf16.mxu0 0
  %255 = vmatmul.mubr.bf16.gmra.mrb[0].mxu0 %v220
  %v256 = vpop.f32.mrb[0].mxu0
  %v257 = vadd.f32 %v204, %v256
  %v258 = vpop.f32.mrb[0].mxu0
  %v259 = vpop.f32.mrb[0].mxu0
  %v260 = vadd.f32 %v204, %v259
  %v261 = vpop.f32.mrb[0].mxu0
  %262 = vdwg.mxu0
  %v263 = vmul.f32 %v257, 0.5
  %v264 = vmul.f32 %v260, 0.5
  %v265 = vtanh.pop %v263
  %v266 = vtanh.pop %v264
  %v267 = vmul.f32 %v265, 0.5
  %v268 = vmul.f32 %v266, 0.5
  %v269 = vadd.f32 %v267, 0.5
  %v270 = vadd.f32 %v268, 0.5
  %v271 = vld [vmem:[%s7] sm:$0x1]
  %v273 = vlaneseq
  %v274 = vshrl.u32 %v273, 7
  %v275 = vsub.s32 0, %v274
  %v276 = vrot.slane %v271, %v275
  %v278 = vmul.f32 %v269, %v276
  %v279 = vmul.f32 %v270, %v276
  %v280 = vsel %vm48, %v278, 0.0
  %281 = vadd.xlane.f32.xlu0 %v280
  %v282 = vpop.xlane.xlu0 %281
  %v283 = vsel %vm48, %v279, 0.0
  %284 = vadd.xlane.f32.xlu0 %v283
  %v285 = vpop.xlane.xlu0 %284
  %vm286 = vcmask 7168
  %287 = vst.msk [vmem:[%s8] sm:$0xff] %vm286, %v282
  %288 = vst.msk [vmem:[%s8 + $0x8] sm:$0xff] %vm286, %v285
  // Predicated region
  $region34: #{tpu_custom_call.1} parent=0 // pred_check
    _
  $region35: #{tpu_custom_call.1} parent=0 // pred_check_branch
    %290 = sbr.rel (0) target = $region37
  $region36: #{tpu_custom_call.1} parent=0 // pred_region
    _
  $region37: #{tpu_custom_call.1} parent=0 // pred_fallthru
    _
  // Predicated region
  $region38: #{tpu_custom_call.1} parent=0 // pred_check
    _
  $region39: #{tpu_custom_call.1} parent=0 // pred_check_branch
    %292 = sbr.rel (0) target = $region41
  $region40: #{tpu_custom_call.1} parent=0 // pred_region
    _
  $region41: #{tpu_custom_call.1} parent=0 // pred_fallthru
    _

</llo_original>
